<compile_context>
chip_gen: v7x
topology: tpu7x:2x2x1
jax: 0.10.0
libtpu: 0.0.40
codegen_flags: <defaults>
</compile_context>

<pallas_src>
import numpy as np
import jax
import jax.numpy as jnp
from jax.experimental import pallas as pl
from jax.experimental.pallas import tpu as pltpu


def _round_up(x, m):
    return ((x + m - 1) // m) * m


def _vmem_limit(block_bytes, headroom=2 * 1024 * 1024):
    """Footprint-derived scoped-VMEM limit: double-buffered blocks + headroom,
    clamped to [16 MiB, 64 MiB] so it is valid on every generation (v7x has 64 MiB)."""
    return int(min(64 * 1024 * 1024, max(16 * 1024 * 1024, 2 * block_bytes + headroom)))


# ---------------- Pallas kernels ----------------


def _input_proj_kernel(x_ref, w_ref, b_ref, o_ref):
    """One row-tile of emb @ W_ih^T + (b_ih + b_hh); bf16 inputs, f32 accumulate, bf16 out."""
    o_ref[...] = (jnp.dot(x_ref[...], w_ref[...], preferred_element_type=jnp.float32)
                  + b_ref[...]).astype(o_ref.dtype)


def _lstm_kernel(xp_ref, sl_ref, whh_ref, out_ref, h_ref, c_ref):
    """One grid step = one (batch tile, Tc-timestep chunk). h_ref / c_ref are constant-index
    (VMEM-resident across time) outputs used as recurrent state. xp_ref already holds
    x @ W_ih^T + bias per step (bf16)."""
    t_chunk = pl.program_id(1)
    Tc = xp_ref.shape[0]
    Hp = h_ref.shape[-1]

    @pl.when(t_chunk == 0)
    def _():
        h_ref[...] = jnp.zeros(h_ref.shape, h_ref.dtype)
        c_ref[...] = jnp.zeros(c_ref.shape, c_ref.dtype)

    # TODO(synk): mark whh/sl as single-buffered (pl.Buffered(1)) once buffer_count=1 is
    # guaranteed on the target jax version; constant-index blocks waste one extra buffer.
    whh = whh_ref[...]                  # (Hp, 4*Hp) bf16, VMEM-resident across the chunk
    sl = sl_ref[...]                    # (Bt, 1) int32
    t0 = t_chunk * Tc

    def step(i, carry):
        h = h_ref[...]                  # f32 state
        c = c_ref[...]
        # bf16 recurrent matmul (MXU-native), f32 accumulation; xp added in f32
        gates = (xp_ref[i].astype(jnp.float32)
                 + jnp.dot(h.astype(jnp.bfloat16), whh,
                           preferred_element_type=jnp.float32))

        # gate order [i, f, g, o]; slices are 128-lane aligned (Hp multiple of 128)
        i_g = jax.nn.sigmoid(gates[:, 0 * Hp:1 * Hp])
        f_g = jax.nn.sigmoid(gates[:, 1 * Hp:2 * Hp])
        g_g = jnp.tanh(gates[:, 2 * Hp:3 * Hp])
        o_g = jax.nn.sigmoid(gates[:, 3 * Hp:4 * Hp])

        c_new = f_g * c + i_g * g_g
        h_new = o_g * jnp.tanh(c_new)

        # pack_padded_sequence semantics: finished sequences freeze h/c, outputs pad to 0
        m = (t0 + i) < sl                                  # (Bt, 1) bool
        out_ref[i] = jnp.where(m, h_new, 0.0).astype(out_ref.dtype)
        h_ref[...] = jnp.where(m, h_new, h)
        c_ref[...] = jnp.where(m, c_new, c)
        return carry

    jax.lax.fori_loop(0, Tc, step, 0, unroll=min(8, Tc))


def _decoder_logits_kernel(x_ref, w_ref, b_ref, logits_ref, lse_ref, m_scr, l_scr):
    """(row tile, vocab tile) step of Linear(nhid -> ntoken): writes the f32 logits tile and
    accumulates an online log-sum-exp across the vocab axis; LSE emitted at the last tile."""
    v = pl.program_id(1)

    @pl.when(v == 0)
    def _():
        m_scr[...] = jnp.full(m_scr.shape, -jnp.inf, jnp.float32)
        l_scr[...] = jnp.zeros(l_scr.shape, jnp.float32)

    logits = (jnp.dot(x_ref[...], w_ref[...], preferred_element_type=jnp.float32)
              + b_ref[...])                                # (Rt, Vt) f32
    logits_ref[...] = logits

    m_prev = m_scr[...]
    m_new = jnp.maximum(m_prev, jnp.max(logits, axis=-1, keepdims=True))
    l_scr[...] = (l_scr[...] * jnp.exp(m_prev - m_new)
                  + jnp.sum(jnp.exp(logits - m_new), axis=-1, keepdims=True))
    m_scr[...] = m_new

    @pl.when(v == pl.num_programs(1) - 1)
    def _():
        lse_ref[...] = m_scr[...] + jnp.log(l_scr[...])


def _decoder_sub_lse_kernel(logits_ref, lse_ref, o_ref):
    """Second pass: log_softmax = logits - lse (elementwise, fully tiled)."""
    o_ref[...] = logits_ref[...] - lse_ref[...]


# ---------------- Wrappers ----------------


def input_projection(x2d, w_ih_t, bias_p):
    """x2d: (N, ninp) bf16; w_ih_t: (ninp, 4*Hp) bf16; bias_p: (1, 4*Hp) f32.
    Returns (N, 4*Hp) bf16."""
    N, ninp = x2d.shape
    G = w_ih_t.shape[1]
    Rt = max(8, min(256, _round_up(N, 8)))
    Np = _round_up(N, Rt)
    x_p = jnp.pad(x2d, ((0, Np - N), (0, 0)))
    blk = Rt * ninp * 2 + ninp * G * 2 + G * 4 + Rt * G * 2
    out = pl.pallas_call(
        _input_proj_kernel,
        out_shape=jax.ShapeDtypeStruct((Np, G), jnp.bfloat16),
        grid_spec=pltpu.PrefetchScalarGridSpec(
            num_scalar_prefetch=0,
            grid=(Np // Rt,),
            in_specs=[
                pl.BlockSpec((Rt, ninp), lambda r: (r, 0)),
                pl.BlockSpec((ninp, G), lambda r: (0, 0)),
                pl.BlockSpec((1, G), lambda r: (0, 0)),
            ],
            out_specs=pl.BlockSpec((Rt, G), lambda r: (r, 0)),
        ),
        compiler_params=pltpu.CompilerParams(
            dimension_semantics=("parallel",),
            vmem_limit_bytes=_vmem_limit(blk),
        ),
    )(x_p, w_ih_t, bias_p)
    return out[:N]


def lstm_forward(x_proj, seq_len_arr, w_hh_t, Tc, Bt):
    """x_proj: (Tp, Bp, 4*Hp) bf16 (bias folded in); seq_len_arr: (Bp, 1) int32;
    w_hh_t: (Hp, 4*Hp) bf16. Returns out (Tp, Bp, Hp) bf16, h_n (Bp, Hp) f32, c_n (Bp, Hp) f32."""
    Tp, Bp, G = x_proj.shape
    Hp = G // 4
    blk = (Tc * Bt * G * 2 + Bt * 4 + Hp * G * 2
           + Tc * Bt * Hp * 2 + 2 * Bt * Hp * 4)
    return pl.pallas_call(
        _lstm_kernel,
        out_shape=(
            jax.ShapeDtypeStruct((Tp, Bp, Hp), jnp.bfloat16),
            jax.ShapeDtypeStruct((Bp, Hp), jnp.float32),
            jax.ShapeDtypeStruct((Bp, Hp), jnp.float32),
        ),
        grid_spec=pltpu.PrefetchScalarGridSpec(
            num_scalar_prefetch=0,
            grid=(Bp // Bt, Tp // Tc),          # (parallel batch tiles, sequential time)
            in_specs=[
                pl.BlockSpec((Tc, Bt, G), lambda b, c: (c, b, 0)),
                pl.BlockSpec((Bt, 1), lambda b, c: (b, 0)),
                pl.BlockSpec((Hp, G), lambda b, c: (0, 0)),
            ],
            out_specs=[
                pl.BlockSpec((Tc, Bt, Hp), lambda b, c: (c, b, 0)),
                pl.BlockSpec((Bt, Hp), lambda b, c: (b, 0)),
                pl.BlockSpec((Bt, Hp), lambda b, c: (b, 0)),
            ],
        ),
        compiler_params=pltpu.CompilerParams(
            dimension_semantics=("parallel", "arbitrary"),
            vmem_limit_bytes=_vmem_limit(blk),
        ),
    )(x_proj, seq_len_arr, w_hh_t)


def decoder_forward(packed, dec_w_t, dec_b, ntoken, Vt):
    """packed: (N, Hp) bf16; dec_w_t: (Hp, Vp) bf16; dec_b: (1, Vp) f32 (pad cols = -1e30).
    Vocab-tiled Linear + online-LSE log_softmax. Returns (N, ntoken) f32 log-probs."""
    N, Hp = packed.shape
    Vp = dec_w_t.shape[1]
    nv = Vp // Vt
    Rt = max(8, min(256, _round_up(N, 8)))
    Np = _round_up(N, Rt)
    nr = Np // Rt
    packed_p = jnp.pad(packed, ((0, Np - N), (0, 0)))

    # TODO(synk): fold the packed-row gather into this DMA via scalar-prefetched row indices
    # instead of the host-side XLA gather feeding `packed`.
    blk1 = Rt * Hp * 2 + Hp * Vt * 2 + Vt * 4 + Rt * Vt * 4 + Rt * 4 + 2 * Rt * 4
    logits, lse = pl.pallas_call(
        _decoder_logits_kernel,
        out_shape=(jax.ShapeDtypeStruct((Np, Vp), jnp.float32),
                   jax.ShapeDtypeStruct((Np, 1), jnp.float32)),
        grid_spec=pltpu.PrefetchScalarGridSpec(
            num_scalar_prefetch=0,
            grid=(nr, nv),
            in_specs=[
                pl.BlockSpec((Rt, Hp), lambda r, v: (r, 0)),
                pl.BlockSpec((Hp, Vt), lambda r, v: (0, v)),
                pl.BlockSpec((1, Vt), lambda r, v: (0, v)),
            ],
            out_specs=[
                pl.BlockSpec((Rt, Vt), lambda r, v: (r, v)),
                pl.BlockSpec((Rt, 1), lambda r, v: (r, 0)),
            ],
            scratch_shapes=[pltpu.VMEM((Rt, 1), jnp.float32),
                            pltpu.VMEM((Rt, 1), jnp.float32)],
        ),
        compiler_params=pltpu.CompilerParams(
            dimension_semantics=("parallel", "arbitrary"),
            vmem_limit_bytes=_vmem_limit(blk1),
        ),
    )(packed_p, dec_w_t, dec_b)

    blk2 = 2 * Rt * Vt * 4 + Rt * 4
    logp = pl.pallas_call(
        _decoder_sub_lse_kernel,
        out_shape=jax.ShapeDtypeStruct((Np, Vp), jnp.float32),
        grid_spec=pltpu.PrefetchScalarGridSpec(
            num_scalar_prefetch=0,
            grid=(nr, nv),
            in_specs=[
                pl.BlockSpec((Rt, Vt), lambda r, v: (r, v)),
                pl.BlockSpec((Rt, 1), lambda r, v: (r, 0)),
            ],
            out_specs=pl.BlockSpec((Rt, Vt), lambda r, v: (r, v)),
        ),
        compiler_params=pltpu.CompilerParams(
            dimension_semantics=("parallel", "parallel"),
            vmem_limit_bytes=_vmem_limit(blk2),
        ),
    )(logits, lse)
    return logp[:N, :ntoken]


def prepare_params(raw):
    """PyTorch-layout params -> kernel layout: pre-transposed bf16 weights, per-gate zero
    padding of nhid -> Hp (multiple of 128 lanes), vocab padded to the decoder tile (bias
    pad = -1e30 so padded logits never contribute to the softmax)."""
    H = raw["w_hh"].shape[1]
    ninp = raw["w_ih"].shape[1]
    ntoken = raw["dec_w"].shape[0]
    Hp = _round_up(H, 128)
    Vt = min(2048, _round_up(ntoken, 128))      # vocab tile (lane-aligned)
    Vp = _round_up(ntoken, Vt)

    def pad_gate_rows(w):                       # (4*H, K) -> (4*Hp, K), zero pad per gate
        K = w.shape[1]
        return jnp.pad(w.reshape(4, H, K), ((0, 0), (0, Hp - H), (0, 0))).reshape(4 * Hp, K)

    w_ih_p = pad_gate_rows(raw["w_ih"])                                   # (4Hp, ninp)
    w_hh_p = jnp.pad(pad_gate_rows(raw["w_hh"]), ((0, 0), (0, Hp - H)))   # (4Hp, Hp)
    bias_p = pad_gate_rows(raw["bias"].reshape(4 * H, 1)).reshape(1, 4 * Hp)
    dec_w_t = jnp.pad(raw["dec_w"].T, ((0, Hp - H), (0, Vp - ntoken)))    # (Hp, Vp)
    dec_b = jnp.pad(raw["dec_b"], ((0, 0), (0, Vp - ntoken)), constant_values=-1e30)

    return {
        "enc_w": raw["enc_w"].astype(jnp.bfloat16),                # (ntoken, ninp) bf16
        "w_ih_t": jnp.asarray(w_ih_p.T).astype(jnp.bfloat16),      # (ninp, 4Hp) bf16
        "w_hh_t": jnp.asarray(w_hh_p.T).astype(jnp.bfloat16),      # (Hp, 4Hp) bf16
        "bias": bias_p.astype(jnp.float32),                        # (1, 4Hp) f32
        "dec_w_t": dec_w_t.astype(jnp.bfloat16),                   # (Hp, Vp) bf16
        "dec_b": dec_b.astype(jnp.float32),                        # (1, Vp) f32
        "H": H, "Hp": Hp, "ninp": ninp, "ntoken": ntoken, "Vt": Vt, "Vp": Vp,
    }


def rnn_model_sents_forward(tokens, seq_len, kp):
    """tokens: (T, B) int32; seq_len: python list, sorted descending (pack_padded contract);
    kp: prepared kernel params. Returns (log_probs (sum(seq_len), ntoken), (h_n, c_n))."""
    T, B = tokens.shape
    H, Hp = kp["H"], kp["Hp"]

    # batch padding: sublane alignment (8) + even split into two 'parallel' tiles when large
    Bp = _round_up(B, 16) if B > 8 else _round_up(B, 8)
    Bt = Bp // 2 if B > 8 else Bp

    # time chunking for the in-kernel recurrence loop (Tc larger, partial unroll in-kernel)
    Tc = min(32, _round_up(T, 8))
    Tp = _round_up(T, Tc)

    # embedding lookup (gather glue)
    # TODO(synk): dropout is stochastic training-time behaviour; implemented as identity (eval).
    emb = jnp.take(kp["enc_w"], tokens, axis=0)                          # (T, B, ninp) bf16
    emb_p = jnp.pad(emb, ((0, Tp - T), (0, Bp - B), (0, 0)))

    # hoisted input projection: one large MXU matmul, bias folded in, bf16 result (halves the
    # x_proj HBM round-trip that feeds the recurrence)
    xproj = input_projection(emb_p.reshape(Tp * Bp, -1), kp["w_ih_t"], kp["bias"])
    x_proj = xproj.reshape(Tp, Bp, 4 * Hp)

    sl_np = np.asarray(seq_len, dtype=np.int32)
    sl_arr = jnp.zeros((Bp, 1), jnp.int32).at[:B, 0].set(jnp.asarray(sl_np))

    out, h_pad, c_pad = lstm_forward(x_proj, sl_arr, kp["w_hh_t"], Tc, Bt)

    # pack valid positions in pack_padded_sequence order (time-major, then batch)
    # TODO(synk): valid_idx / seq_len are trace-time constants -> recompiles per length pattern.
    valid_idx = np.array([t * Bp + b for t in range(T) for b in range(B) if t < sl_np[b]],
                         dtype=np.int32)
    packed = out.reshape(Tp * Bp, Hp)[valid_idx]                         # (sum(seq_len), Hp) bf16

    logp = decoder_forward(packed, kp["dec_w_t"], kp["dec_b"], kp["ntoken"], kp["Vt"])
    hidden = (h_pad[None, :B, :H], c_pad[None, :B, :H])                  # (nlayers=1, B, H)
    return logp, hidden


# ---------------- Pure-JAX reference (sanity check) ----------------


def _ref_forward(tokens, seq_len, params):
    T, B = tokens.shape
    H = params["w_hh"].shape[1]
    emb = jnp.take(params["enc_w"], tokens, axis=0).astype(jnp.float32)
    sl = np.asarray(seq_len)
    mask = jnp.asarray((np.arange(T)[:, None] < sl[None, :]).astype(np.float32)[:, :, None])

    def step(carry, inp):
        h, c = carry
        x, m = inp
        gates = x @ params["w_ih"].T + h @ params["w_hh"].T + params["bias"]
        i = jax.nn.sigmoid(gates[:, 0 * H:1 * H])
        f = jax.nn.sigmoid(gates[:, 1 * H:2 * H])
        g = jnp.tanh(gates[:, 2 * H:3 * H])
        o = jax.nn.sigmoid(gates[:, 3 * H:4 * H])
        c_new = f * c + i * g
        h_new = o * jnp.tanh(c_new)
        h2 = m * h_new + (1 - m) * h
        c2 = m * c_new + (1 - m) * c
        return (h2, c2), m * h_new

    init = (jnp.zeros((B, H), jnp.float32), jnp.zeros((B, H), jnp.float32))
    (h_n, c_n), out = jax.lax.scan(step, init, (emb, mask))
    valid_idx = np.array([t * B + b for t in range(T) for b in range(B) if t < sl[b]],
                         dtype=np.int32)
    packed = out.reshape(T * B, H)[valid_idx]
    logits = packed @ params["dec_w"].T + params["dec_b"]
    logp = jax.nn.log_softmax(logits, axis=-1)
    return logp, (h_n[None], c_n[None])


# ---------------- Main ----------------

if __name__ == "__main__":
    # small shapes consistent with the module
    ntoken, ninp, nhid, nlayers = 32, 16, 32, 1
    T, B = 8, 2
    seq_len = [8, 5]            # must be sorted descending (pack_padded_sequence contract)

    key = jax.random.PRNGKey(0)
    k_enc, k_ih, k_hh, k_bih, k_bhh, k_dec, k_tok = jax.random.split(key, 7)

    initrange = 0.1
    stdv = 1.0 / np.sqrt(nhid)
    raw_params = {
        "enc_w": jax.random.uniform(k_enc, (ntoken, ninp), jnp.float32, -initrange, initrange),
        "w_ih": jax.random.uniform(k_ih, (4 * nhid, ninp), jnp.float32, -stdv, stdv),
        "w_hh": jax.random.uniform(k_hh, (4 * nhid, nhid), jnp.float32, -stdv, stdv),
        # PyTorch LSTM has b_ih + b_hh; they only ever appear summed in the forward pass.
        "bias": (jax.random.uniform(k_bih, (1, 4 * nhid), jnp.float32, -stdv, stdv)
                 + jax.random.uniform(k_bhh, (1, 4 * nhid), jnp.float32, -stdv, stdv)),
        "dec_w": jax.random.uniform(k_dec, (ntoken, nhid), jnp.float32, -initrange, initrange),
        "dec_b": jnp.zeros((1, ntoken), jnp.float32),
    }
    params = prepare_params(raw_params)

    tokens = jax.random.randint(k_tok, (T, B), 0, ntoken, dtype=jnp.int32)

    logp, (h_n, c_n) = rnn_model_sents_forward(tokens, seq_len, params)
    jax.block_until_ready((logp, h_n, c_n))

    # sanity check vs pure-JAX f32 reference (embedding / input projection / recurrent matmul /
    # decoder all use bf16 MXU inputs with f32 accumulation -> loosened tolerances)
    logp_ref, (h_ref, c_ref) = _ref_forward(tokens, seq_len, raw_params)
    assert logp.shape == (sum(seq_len), ntoken)
    assert h_n.shape == (nlayers, B, nhid) and c_n.shape == (nlayers, B, nhid)
    np.testing.assert_allclose(np.asarray(logp), np.asarray(logp_ref), rtol=3e-2, atol=3e-2)
    np.testing.assert_allclose(np.asarray(h_n), np.asarray(h_ref), rtol=2e-2, atol=2e-2)
    np.testing.assert_allclose(np.asarray(c_n), np.asarray(c_ref), rtol=2e-2, atol=2e-2)

    print("KERNEL_OK")
</pallas_src>

<mosaic_0001>
module attributes {stable_mosaic.version = 11 : i64} {
  func.func @_input_proj_kernel(%arg0: i32, %arg1: memref<64x16xbf16, #tpu.memory_space<vmem>>, %arg2: memref<16x512xbf16, #tpu.memory_space<vmem>>, %arg3: memref<1x512xf32, #tpu.memory_space<vmem>>, %arg4: memref<64x512xbf16, #tpu.memory_space<vmem>>) attributes {dimension_semantics = [#tpu.dimension_semantics<parallel>], iteration_bounds = array<i64: 1>, scalar_prefetch = 0 : i64, scratch_operands = 0 : i64, tpu.core_type = #tpu.core_type<tc>, window_params = [{transform_indices = @transform_0, window_bounds = array<i64: 64, 16>}, {pipeline_mode = #tpu.pipeline_mode<synchronous>, transform_indices = @transform_1, window_bounds = array<i64: 16, 512>}, {pipeline_mode = #tpu.pipeline_mode<synchronous>, transform_indices = @transform_2, window_bounds = array<i64: 1, 512>}, {transform_indices = @transform_3, window_bounds = array<i64: 64, 512>}]} {
    %c0 = arith.constant 0 : index
    %c0_0 = arith.constant 0 : index
    %0 = vector.load %arg1[%c0, %c0_0] : memref<64x16xbf16, #tpu.memory_space<vmem>>, vector<64x16xbf16>
    %c0_1 = arith.constant 0 : index
    %c0_2 = arith.constant 0 : index
    %1 = vector.load %arg2[%c0_1, %c0_2] : memref<16x512xbf16, #tpu.memory_space<vmem>>, vector<16x512xbf16>
    %cst = arith.constant dense<0.000000e+00> : vector<64x512xf32>
    %2 = tpu.matmul %0, %1, %cst {dimension_numbers = #tpu.dot_dimension_numbers<[1], [0], [0], [1], [0, 0, 1, 1], [], []>} : vector<64x16xbf16>, vector<16x512xbf16>, vector<64x512xf32> -> vector<64x512xf32>
    %c0_3 = arith.constant 0 : index
    %c0_4 = arith.constant 0 : index
    %3 = vector.load %arg3[%c0_3, %c0_4] : memref<1x512xf32, #tpu.memory_space<vmem>>, vector<1x512xf32>
    %4 = vector.broadcast %3 : vector<1x512xf32> to vector<64x512xf32>
    %5 = arith.addf %2, %4 : vector<64x512xf32>
    %6 = arith.truncf %5 : vector<64x512xf32> to vector<64x512xbf16>
    %c0_5 = arith.constant 0 : index
    %c0_6 = arith.constant 0 : index
    %7 = vector.load %arg4[%c0_5, %c0_6] : memref<64x512xbf16, #tpu.memory_space<vmem>>, vector<64x512xbf16>
    tpu.vector_store %arg4[%c0_5, %c0_6], %6 {strides = array<i32>} : memref<64x512xbf16, #tpu.memory_space<vmem>>, vector<64x512xbf16>,
    return
  }
  func.func @transform_0(%arg0: i32) -> (i32, i32) {
    %c0_i32 = arith.constant 0 : i32
    %c0_i32_0 = arith.constant 0 : i32
    return %arg0, %c0_i32 : i32, i32
  }
  func.func @transform_1(%arg0: i32) -> (i32, i32) {
    %c0_i32 = arith.constant 0 : i32
    %c0_i32_0 = arith.constant 0 : i32
    %c0_i32_1 = arith.constant 0 : i32
    return %c0_i32, %c0_i32_0 : i32, i32
  }
  func.func @transform_2(%arg0: i32) -> (i32, i32) {
    %c0_i32 = arith.constant 0 : i32
    %c0_i32_0 = arith.constant 0 : i32
    %c0_i32_1 = arith.constant 0 : i32
    return %c0_i32, %c0_i32_0 : i32, i32
  }
  func.func @transform_3(%arg0: i32) -> (i32, i32) {
    %c0_i32 = arith.constant 0 : i32
    %c0_i32_0 = arith.constant 0 : i32
    return %arg0, %c0_i32 : i32, i32
  }
}

</mosaic_0001>

<llo_original>
// kernel: tpu_custom_call.1
$region0: #{tpu_custom_call.1}
  #allocation0 [shape = 'u32[]', space=smem, size = 0x4, offset = 0x4, fixed_abs, tag = 'smem constant byte address 0x4 - core index']
  #allocation1 [shape = 'u32[144,128]{1,0:T(1,128)}', space=vmem, size = 0x12000, scoped, tag = 'internal scratch']
  %s0 = inlined_call_operand.vmem [shape: bf16[64,16], index: 0, kind: input, shape index: {}]
  %s1 = inlined_call_operand.vmem [shape: bf16[16,512], index: 1, kind: input, shape index: {}]
  %s2 = inlined_call_operand.vmem [shape: f32[1,512], index: 2, kind: input, shape index: {}]
  %s3 = inlined_call_operand.hbm [shape: bf16[64,512], index: 3, kind: output, shape index: {}]
  %s4 = sld [smem:[#allocation0]]
  $region22: #{tpu_custom_call.1} parent=0
    _
  %s6 = ssub.s32 1, %s4
  %s7 = scalar_select 0, %s6, %s4
  $region1: #{tpu_custom_call.1} parent=0
    #allocation2 [shape = 'u8[65536]{0}', space=vmem, size = 0x10000, scoped, tag = 'output window, operand 0, single buffered']
    #allocation3 [shape = 's32[1]{0}', space=sflag, size = 0x4, scoped, tag = 'scoped memory for tpu_custom_call.1']
    %8 = vsyncpa [#allocation3], 0
    // Predicated region
    $region2: #{tpu_custom_call.1} parent=1 // pred_check
      _
    $region3: #{tpu_custom_call.1} parent=1 // pred_check_branch
      %10 = sbr.rel (0) target = $region5
    $region4: #{tpu_custom_call.1} parent=1 // pred_region
      _
    $region5: #{tpu_custom_call.1} parent=1 // pred_fallthru
      _
    // Predicated region
    $region6: #{tpu_custom_call.1} parent=1 // pred_check
      _
    $region7: #{tpu_custom_call.1} parent=1 // pred_check_branch
      %12 = sbr.rel (0) target = $region9
    $region8: #{tpu_custom_call.1} parent=1 // pred_region
      _
    $region9: #{tpu_custom_call.1} parent=1 // pred_fallthru
      _
    // Predicated region
    $region10: #{tpu_custom_call.1} parent=1 // pred_check
      _
    $region11: #{tpu_custom_call.1} parent=1 // pred_check_branch
      %14 = sbr.rel (0) target = $region13
    $region12: #{tpu_custom_call.1} parent=1 // pred_region
      _
    $region13: #{tpu_custom_call.1} parent=1 // pred_fallthru
      _
    %v16 = vld [vmem:[%s0] sm:$0xf]
    %v17 = vld [vmem:[%s0 + $0x4] sm:$0xf]
    %v18 = vld [vmem:[%s0 + $0x8] sm:$0xf]
    %v19 = vld [vmem:[%s0 + $0xc] sm:$0xf]
    %v20 = vld [vmem:[%s0 + $0x10] sm:$0xf]
    %v21 = vld [vmem:[%s0 + $0x14] sm:$0xf]
    %v22 = vld [vmem:[%s0 + $0x18] sm:$0xf]
    %v23 = vld [vmem:[%s0 + $0x1c] sm:$0xf]
    %v24 = vld [vmem:[%s1] sm:$0xff]
    %v25 = vld [vmem:[%s1 + $0x8] sm:$0xff]
    %v26 = vld [vmem:[%s1 + $0x10] sm:$0xff]
    %v27 = vld [vmem:[%s1 + $0x18] sm:$0xff]
    %v28 = vld [vmem:[%s2] sm:$0xf]
    %v30 = vlaneseq
    %v31 = vshrl.u32 %v30, 7
    %v32 = vsub.s32 0, %v31
    %v33 = vrot.slane %v28, %v32
    %v34 = vlaneseq
    %v35 = vshrl.u32 %v34, 7
    %v36 = vsub.s32 1, %v35
    %v37 = vrot.slane %v28, %v36
    %v38 = vlaneseq
    %v39 = vshrl.u32 %v38, 7
    %v40 = vsub.s32 2, %v39
    %v41 = vrot.slane %v28, %v40
    %v42 = vlaneseq
    %v43 = vshrl.u32 %v42, 7
    %v44 = vsub.s32 3, %v43
    %v45 = vrot.slane %v28, %v44
    %v58 = vunpack.c.l.b16 %v16
    %v59 = vunpack.c.l.b16 %v17
    %v60 = vunpack.c.l.b16 %v18
    %v61 = vunpack.c.l.b16 %v19
    %v62 = vunpack.c.l.b16 %v20
    %v63 = vunpack.c.l.b16 %v21
    %v64 = vunpack.c.l.b16 %v22
    %v65 = vunpack.c.l.b16 %v23
    %v66 = vpack.c.b16 %v59, %v58
    %v67 = vpack.c.b16 %v61, %v60
    %v68 = vpack.c.b16 %v63, %v62
    %v69 = vpack.c.b16 %v65, %v64
    %v74 = vunpack.c.l.b16 %v24
    %v75 = vunpack.c.h.b16 %v24
    %v76 = vunpack.c.l.b16 %v25
    %v77 = vunpack.c.h.b16 %v25
    %v78 = vunpack.c.l.b16 %v26
    %v79 = vunpack.c.h.b16 %v26
    %v80 = vunpack.c.l.b16 %v27
    %v81 = vunpack.c.h.b16 %v27
    %v82 = vpack.c.b16 %v78, %v74
    %v83 = vpack.c.b16 %v79, %v75
    %v84 = vpack.c.b16 %v80, %v76
    %v85 = vpack.c.b16 %v81, %v77
    %vm90 = vcmask 130048
    %v92 = vsel %vm90, %v66, 0
    %v95 = vsel %vm90, %v67, 0
    %v98 = vsel %vm90, %v68, 0
    %v101 = vsel %vm90, %v69, 0
    %103 = vmatprep.subr.bf16.mxu0 %v83
    %104 = vmatpush1.bf16.msra.mxu0 %v82
    %105 = vmatprep.subr.bf16.mxu0 0
    %106 = vmatpush1.bf16.msra.mxu0 0
    %107 = vmatprep.subr.bf16.mxu0 0
    %108 = vmatpush1.bf16.msra.mxu0 0
    %109 = vmatprep.subr.bf16.mxu0 0
    %110 = vmatpush1.bf16.msra.mxu0 0
    %111 = vmatprep.subr.bf16.mxu0 0
    %112 = vmatpush1.bf16.msra.mxu0 0
    %113 = vmatprep.subr.bf16.mxu0 0
    %114 = vmatpush1.bf16.msra.mxu0 0
    %115 = vmatprep.subr.bf16.mxu0 0
    %116 = vmatpush1.bf16.msra.mxu0 0
    %117 = vmatprep.subr.bf16.mxu0 0
    %118 = vmatpush1.bf16.msra.mxu0 0
    %119 = vmatprep.subr.bf16.mxu0 0
    %120 = vmatpush1.bf16.msra.mxu0 0
    %121 = vmatprep.subr.bf16.mxu0 0
    %122 = vmatpush1.bf16.msra.mxu0 0
    %123 = vmatprep.subr.bf16.mxu0 0
    %124 = vmatpush1.bf16.msra.mxu0 0
    %125 = vmatprep.subr.bf16.mxu0 0
    %126 = vmatpush1.bf16.msra.mxu0 0
    %127 = vmatprep.subr.bf16.mxu0 0
    %128 = vmatpush1.bf16.msra.mxu0 0
    %129 = vmatprep.subr.bf16.mxu0 0
    %130 = vmatpush1.bf16.msra.mxu0 0
    %131 = vmatprep.subr.bf16.mxu0 0
    %132 = vmatpush1.bf16.msra.mxu0 0
    %133 = vmatprep.subr.bf16.mxu0 0
    %134 = vmatpush1.bf16.msra.mxu0 0
    %135 = vmatprep.mubr.bf16.mxu0 0
    %136 = vmatmul.mubr.bf16.gmra.mrb[0].mxu0 %v92
    %v137 = vpop.f32.mrb[0].mxu0
    %v138 = vadd.f32 %v33, %v137
    %v139 = vpop.f32.mrb[0].mxu0
    %v140 = vadd.f32 %v37, %v139
    %v141 = vpop.f32.mrb[0].mxu0
    %v142 = vadd.f32 %v33, %v141
    %v143 = vpop.f32.mrb[0].mxu0
    %v144 = vadd.f32 %v37, %v143
    %145 = vmatprep.mubr.bf16.mxu0 0
    %146 = vmatmul.mubr.bf16.gmra.mrb[0].mxu0 %v95
    %v147 = vpop.f32.mrb[0].mxu0
    %v148 = vadd.f32 %v33, %v147
    %v149 = vpop.f32.mrb[0].mxu0
    %v150 = vadd.f32 %v37, %v149
    %v151 = vpop.f32.mrb[0].mxu0
    %v152 = vadd.f32 %v33, %v151
    %v153 = vpop.f32.mrb[0].mxu0
    %v154 = vadd.f32 %v37, %v153
    %155 = vmatprep.mubr.bf16.mxu0 0
    %156 = vmatmul.mubr.bf16.gmra.mrb[0].mxu0 %v98
    %v157 = vpop.f32.mrb[0].mxu0
    %v158 = vadd.f32 %v33, %v157
    %v159 = vpop.f32.mrb[0].mxu0
    %v160 = vadd.f32 %v37, %v159
    %v161 = vpop.f32.mrb[0].mxu0
    %v162 = vadd.f32 %v33, %v161
    %v163 = vpop.f32.mrb[0].mxu0
    %v164 = vadd.f32 %v37, %v163
    %165 = vmatprep.mubr.bf16.mxu0 0
    %166 = vmatmul.mubr.bf16.gmra.mrb[0].mxu0 %v101
    %v167 = vpop.f32.mrb[0].mxu0
    %v168 = vadd.f32 %v33, %v167
    %v169 = vpop.f32.mrb[0].mxu0
    %v170 = vadd.f32 %v37, %v169
    %v171 = vpop.f32.mrb[0].mxu0
    %v172 = vadd.f32 %v33, %v171
    %v173 = vpop.f32.mrb[0].mxu0
    %v174 = vadd.f32 %v37, %v173
    %175 = vdwg.mxu0
    %176 = vmatprep.subr.bf16.mxu0 %v85
    %177 = vmatpush1.bf16.msra.mxu0 %v84
    %178 = vmatprep.subr.bf16.mxu0 0
    %179 = vmatpush1.bf16.msra.mxu0 0
    %180 = vmatprep.subr.bf16.mxu0 0
    %181 = vmatpush1.bf16.msra.mxu0 0
    %182 = vmatprep.subr.bf16.mxu0 0
    %183 = vmatpush1.bf16.msra.mxu0 0
    %184 = vmatprep.subr.bf16.mxu0 0
    %185 = vmatpush1.bf16.msra.mxu0 0
    %186 = vmatprep.subr.bf16.mxu0 0
    %187 = vmatpush1.bf16.msra.mxu0 0
    %188 = vmatprep.subr.bf16.mxu0 0
    %189 = vmatpush1.bf16.msra.mxu0 0
    %190 = vmatprep.subr.bf16.mxu0 0
    %191 = vmatpush1.bf16.msra.mxu0 0
    %192 = vmatprep.subr.bf16.mxu0 0
    %193 = vmatpush1.bf16.msra.mxu0 0
    %194 = vmatprep.subr.bf16.mxu0 0
    %195 = vmatpush1.bf16.msra.mxu0 0
    %196 = vmatprep.subr.bf16.mxu0 0
    %197 = vmatpush1.bf16.msra.mxu0 0
    %198 = vmatprep.subr.bf16.mxu0 0
    %199 = vmatpush1.bf16.msra.mxu0 0
    %200 = vmatprep.subr.bf16.mxu0 0
    %201 = vmatpush1.bf16.msra.mxu0 0
    %202 = vmatprep.subr.bf16.mxu0 0
    %203 = vmatpush1.bf16.msra.mxu0 0
    %204 = vmatprep.subr.bf16.mxu0 0
    %205 = vmatpush1.bf16.msra.mxu0 0
    %206 = vmatprep.subr.bf16.mxu0 0
    %207 = vmatpush1.bf16.msra.mxu0 0
    %208 = vmatprep.mubr.bf16.mxu0 0
    %209 = vmatmul.mubr.bf16.gmra.mrb[0].mxu0 %v92
    %v210 = vpop.f32.mrb[0].mxu0
    %v211 = vadd.f32 %v41, %v210
    %v212 = vpop.f32.mrb[0].mxu0
    %v213 = vadd.f32 %v45, %v212
    %v214 = vpop.f32.mrb[0].mxu0
    %v215 = vadd.f32 %v41, %v214
    %v216 = vpop.f32.mrb[0].mxu0
    %v217 = vadd.f32 %v45, %v216
    %218 = vmatprep.mubr.bf16.mxu0 0
    %219 = vmatmul.mubr.bf16.gmra.mrb[0].mxu0 %v95
    %v220 = vpop.f32.mrb[0].mxu0
    %v221 = vadd.f32 %v41, %v220
    %v222 = vpop.f32.mrb[0].mxu0
    %v223 = vadd.f32 %v45, %v222
    %v224 = vpop.f32.mrb[0].mxu0
    %v225 = vadd.f32 %v41, %v224
    %v226 = vpop.f32.mrb[0].mxu0
    %v227 = vadd.f32 %v45, %v226
    %228 = vmatprep.mubr.bf16.mxu0 0
    %229 = vmatmul.mubr.bf16.gmra.mrb[0].mxu0 %v98
    %v230 = vpop.f32.mrb[0].mxu0
    %v231 = vadd.f32 %v41, %v230
    %v232 = vpop.f32.mrb[0].mxu0
    %v233 = vadd.f32 %v45, %v232
    %v234 = vpop.f32.mrb[0].mxu0
    %v235 = vadd.f32 %v41, %v234
    %v236 = vpop.f32.mrb[0].mxu0
    %v237 = vadd.f32 %v45, %v236
    %238 = vmatprep.mubr.bf16.mxu0 0
    %239 = vmatmul.mubr.bf16.gmra.mrb[0].mxu0 %v101
    %v240 = vpop.f32.mrb[0].mxu0
    %v241 = vadd.f32 %v41, %v240
    %v242 = vpop.f32.mrb[0].mxu0
    %v243 = vadd.f32 %v45, %v242
    %v244 = vpop.f32.mrb[0].mxu0
    %v245 = vadd.f32 %v41, %v244
    %v246 = vpop.f32.mrb[0].mxu0
    %v247 = vadd.f32 %v45, %v246
    %248 = vdwg.mxu0
    %v249 = vpack.c.bf16 %v142, %v138
    %v250 = vpack.c.bf16 %v144, %v140
    %v251 = vpack.c.bf16 %v215, %v211
    %v252 = vpack.c.bf16 %v217, %v213
    %v253 = vpack.c.bf16 %v152, %v148
    %v254 = vpack.c.bf16 %v154, %v150
    %v255 = vpack.c.bf16 %v225, %v221
    %v256 = vpack.c.bf16 %v227, %v223
    %v257 = vpack.c.bf16 %v162, %v158
    %v258 = vpack.c.bf16 %v164, %v160
    %v259 = vpack.c.bf16 %v235, %v231
    %v260 = vpack.c.bf16 %v237, %v233
    %v261 = vpack.c.bf16 %v172, %v168
    %v262 = vpack.c.bf16 %v174, %v170
    %v263 = vpack.c.bf16 %v245, %v241
    %v264 = vpack.c.bf16 %v247, %v243
    %v281 = vunpack.c.l.b16 %v249
    %v282 = vunpack.c.l.b16 %v250
    %v283 = vunpack.c.l.b16 %v251
    %v284 = vunpack.c.l.b16 %v252
    %v285 = vunpack.c.h.b16 %v249
    %v286 = vunpack.c.h.b16 %v250
    %v287 = vunpack.c.h.b16 %v251
    %v288 = vunpack.c.h.b16 %v252
    %v289 = vunpack.c.l.b16 %v253
    %v290 = vunpack.c.l.b16 %v254
    %v291 = vunpack.c.l.b16 %v255
    %v292 = vunpack.c.l.b16 %v256
    %v293 = vunpack.c.h.b16 %v253
    %v294 = vunpack.c.h.b16 %v254
    %v295 = vunpack.c.h.b16 %v255
    %v296 = vunpack.c.h.b16 %v256
    %v297 = vunpack.c.l.b16 %v257
    %v298 = vunpack.c.l.b16 %v258
    %v299 = vunpack.c.l.b16 %v259
    %v300 = vunpack.c.l.b16 %v260
    %v301 = vunpack.c.h.b16 %v257
    %v302 = vunpack.c.h.b16 %v258
    %v303 = vunpack.c.h.b16 %v259
    %v304 = vunpack.c.h.b16 %v260
    %v305 = vunpack.c.l.b16 %v261
    %v306 = vunpack.c.l.b16 %v262
    %v307 = vunpack.c.l.b16 %v263
    %v308 = vunpack.c.l.b16 %v264
    %v309 = vunpack.c.h.b16 %v261
    %v310 = vunpack.c.h.b16 %v262
    %v311 = vunpack.c.h.b16 %v263
    %v312 = vunpack.c.h.b16 %v264
    %v313 = vpack.c.b16 %v282, %v281
    %v314 = vpack.c.b16 %v284, %v283
    %v315 = vpack.c.b16 %v286, %v285
    %v316 = vpack.c.b16 %v288, %v287
    %v317 = vpack.c.b16 %v290, %v289
    %v318 = vpack.c.b16 %v292, %v291
    %v319 = vpack.c.b16 %v294, %v293
    %v320 = vpack.c.b16 %v296, %v295
    %v321 = vpack.c.b16 %v298, %v297
    %v322 = vpack.c.b16 %v300, %v299
    %v323 = vpack.c.b16 %v302, %v301
    %v324 = vpack.c.b16 %v304, %v303
    %v325 = vpack.c.b16 %v306, %v305
    %v326 = vpack.c.b16 %v308, %v307
    %v327 = vpack.c.b16 %v310, %v309
    %v328 = vpack.c.b16 %v312, %v311
    %345 = vst [vmem:[#allocation2] sm:$0xff] %v313
    %346 = vst [vmem:[#allocation2 + $0x8] sm:$0xff] %v314
    %347 = vst [vmem:[#allocation2 + $0x10] sm:$0xff] %v315
    %348 = vst [vmem:[#allocation2 + $0x18] sm:$0xff] %v316
    %349 = vst [vmem:[#allocation2 + $0x20] sm:$0xff] %v317
    %350 = vst [vmem:[#allocation2 + $0x28] sm:$0xff] %v318
    %351 = vst [vmem:[#allocation2 + $0x30] sm:$0xff] %v319
    %352 = vst [vmem:[#allocation2 + $0x38] sm:$0xff] %v320
    %353 = vst [vmem:[#allocation2 + $0x40] sm:$0xff] %v321
    %354 = vst [vmem:[#allocation2 + $0x48] sm:$0xff] %v322
    %355 = vst [vmem:[#allocation2 + $0x50] sm:$0xff] %v323
    %356 = vst [vmem:[#allocation2 + $0x58] sm:$0xff] %v324
    %357 = vst [vmem:[#allocation2 + $0x60] sm:$0xff] %v325
    %358 = vst [vmem:[#allocation2 + $0x68] sm:$0xff] %v326
    %359 = vst [vmem:[#allocation2 + $0x70] sm:$0xff] %v327
    %360 = vst [vmem:[#allocation2 + $0x78] sm:$0xff] %v328
    // Predicated region
    $region14: #{tpu_custom_call.1} parent=1 // pred_check
      _
    $region15: #{tpu_custom_call.1} parent=1 // pred_check_branch
      %362 = sbr.rel (0) target = $region17
    $region16: #{tpu_custom_call.1} parent=1 // pred_region
      %s364 = ssub.s32 2048, 2048
      %365 = vsyncadd [#allocation3], %s364
      %s366 = sshll.u32 [#allocation2], 4
      %s367 = int_to_ptr.vmem [resolvable:$true] %s366
      %372 = dma.vmem_to_hbm [thread:$0]  %s367, 2048, %s3, [#allocation3], 256, 256, 16
    $region17: #{tpu_custom_call.1} parent=1 // pred_fallthru
      _
    // Predicated region
    $region18: #{tpu_custom_call.1} parent=1 // pred_check
      _
    $region19: #{tpu_custom_call.1} parent=1 // pred_check_branch
      %374 = sbr.rel (0) target = $region21
    $region20: #{tpu_custom_call.1} parent=1 // pred_region
      %375 = dma.done [#allocation3], 2048
    $region21: #{tpu_custom_call.1} parent=1 // pred_fallthru
      _
    %376 = vsyncpa [#allocation3], 1

</llo_original>
